<compile_context>
chip_gen: v7x
topology: tpu7x:2x2x1
jax: 0.10.0
libtpu: 0.0.40
codegen_flags: <defaults>
</compile_context>

<pallas_src>
import functools

import jax
import jax.numpy as jnp
from jax.experimental import pallas as pl
from jax.experimental.pallas import tpu as pltpu


def _ncd_kernel(stu_ids_ref, exer_ids_ref,        # (1, 1, TILE_B) int32 tiles
                stu_tbl_ref,                      # (K, S)   student_emb^T
                ex_tbl_ref,                       # (2K+1, E) [kd | qk | ed]^T
                w1_ref, b1_ref,                   # (H1, K), (H1, 1)
                w2_ref, b2_ref,                   # (H2, H1), (H2, 1)
                w3_ref, b3_ref,                   # (H2, 1),  (1, 1)
                out_ref):                         # (1, 1, TILE_B)
    k = w1_ref.shape[1]
    tile_b = out_ref.shape[-1]
    n_stu = stu_tbl_ref.shape[1]
    n_exer = ex_tbl_ref.shape[1]

    stu_ids = stu_ids_ref[0]                      # (1, TILE_B) int32, lane-dense
    exer_ids = exer_ids_ref[0]                    # (1, TILE_B) int32

    # --- Gather via one-hot matmul on the MXU (tables are VMEM-resident). ---
    stu_oh = (jax.lax.broadcasted_iota(jnp.int32, (n_stu, tile_b), 0)
              == stu_ids).astype(jnp.float32)     # (S, TILE_B)
    ex_oh = (jax.lax.broadcasted_iota(jnp.int32, (n_exer, tile_b), 0)
             == exer_ids).astype(jnp.float32)     # (E, TILE_B)

    stu_rows = jnp.dot(stu_tbl_ref[...], stu_oh,
                       preferred_element_type=jnp.float32)   # (K, TILE_B)
    ex_rows = jnp.dot(ex_tbl_ref[...], ex_oh,
                      preferred_element_type=jnp.float32)    # (2K+1, TILE_B)

    stat = jax.nn.sigmoid(stu_rows)                           # (K, TILE_B)
    kd = jax.nn.sigmoid(ex_rows[:k, :])                       # (K, TILE_B)
    qk = ex_rows[k:2 * k, :]                                  # (K, TILE_B)
    ed = jax.nn.sigmoid(ex_rows[2 * k:2 * k + 1, :])          # (1, TILE_B)

    # Softmax over the knowledge dim (sublane axis); exact divide.
    qk_max = jnp.max(qk, axis=0, keepdims=True)
    qk_exp = jnp.exp(qk - qk_max)
    qk_soft = qk_exp / jnp.sum(qk_exp, axis=0, keepdims=True)

    x = ed * (stat - kd) * qk_soft                            # (K, TILE_B)

    # Prednet, feature-major: torch (out, in) weights used directly.
    h1 = jax.nn.sigmoid(
        jnp.dot(w1_ref[...], x, preferred_element_type=jnp.float32)
        + b1_ref[...])                                        # (H1, TILE_B)
    h2 = jax.nn.sigmoid(
        jnp.dot(w2_ref[...], h1, preferred_element_type=jnp.float32)
        + b2_ref[...])                                        # (H2, TILE_B)

    # Width-1 head: VPU multiply + sublane (XLU) reduction -> lane-dense row.
    logit = jnp.sum(h2 * w3_ref[...], axis=0, keepdims=True) + b3_ref[...]
    out_ref[0] = jax.nn.sigmoid(logit).astype(out_ref.dtype)  # (1, TILE_B)


def _round_up(x, m):
    return ((x + m - 1) // m) * m


def _vmem_tile_bytes(shape, itemsize=4):
    """Bytes a block occupies in VMEM, accounting for (8, 128) tile padding."""
    shape = tuple(int(d) for d in shape)
    if len(shape) == 1:
        shape = (1,) + shape
    lead = 1
    for d in shape[:-2]:
        lead *= d
    return lead * _round_up(shape[-2], 8) * _round_up(shape[-1], 128) * itemsize


@functools.partial(jax.jit, static_argnames=("max_tile_b",))
def ncd_forward(params, stu_id, input_exercise, *, max_tile_b=256):
    """Full Net.forward: gather + elementwise + softmax + MLP in one kernel."""
    B = stu_id.shape[0]
    S, K = params["student_emb"].shape
    E = params["k_difficulty"].shape[0]
    H1 = params["w1"].shape[0]
    H2 = params["w2"].shape[0]

    # Batch tile is a multiple of 128 so every tensor in the kernel is
    # lane-dense along the batch axis.
    tile_b = int(min(max_tile_b, _round_up(B, 128)))
    n_tiles = int(pl.cdiv(B, tile_b))
    padded_b = n_tiles * tile_b

    # Pad ids with 0 (a valid row) so padded tail rows compute garbage that is
    # simply sliced off below.
    stu_ids = jnp.zeros((padded_b,), jnp.int32).at[:B].set(
        stu_id.astype(jnp.int32)).reshape(n_tiles, 1, tile_b)
    exer_ids = jnp.zeros((padded_b,), jnp.int32).at[:B].set(
        input_exercise.astype(jnp.int32)).reshape(n_tiles, 1, tile_b)

    # Transposed (feature-major) tables; the three exercise tables are fused
    # into one so there is a single exercise gather per row.  (In production
    # these would be stored pre-fused/pre-transposed; the concat here is a
    # cheap one-off XLA op.)
    stu_tbl_t = params["student_emb"].T                                # (K, S)
    ex_tbl_t = jnp.concatenate(
        [params["k_difficulty"].T,                                     # (K, E)
         params["ques_knowledge"].T,                                   # (K, E)
         params["e_difficulty"].T], axis=0)                            # (1, E)

    w1 = params["w1"]                                                  # (H1, K)
    w2 = params["w2"]                                                  # (H2, H1)
    b1 = params["b1"].reshape(H1, 1)
    b2 = params["b2"].reshape(H2, 1)
    w3 = params["w3"].reshape(H2, 1)
    b3 = params["b3"].reshape(1, 1)

    def tile_spec(shape):                       # per-batch-tile blocks
        return pl.BlockSpec(shape, lambda i: (i, 0, 0))

    def const_spec(shape):                      # VMEM-resident, fetched once
        return pl.BlockSpec(shape, lambda i: (0, 0))

    # VMEM budget with lane/sublane padding accounted; keep well under v7x's
    # 64 MiB (v5e/v6e have 128 MiB so this is always safe there too).
    resident = sum(_vmem_tile_bytes(s) for s in (
        (1, 1, tile_b), (1, 1, tile_b),          # id tiles
        (K, S), (2 * K + 1, E),                  # tables
        (H1, K), (H1, 1), (H2, H1), (H2, 1),
        (H2, 1), (1, 1),
        (1, 1, tile_b)))                         # output tile
    live = sum(_vmem_tile_bytes(s) for s in (
        (S, tile_b), (E, tile_b),                # one-hot matrices
        (H1, tile_b), (H2, tile_b)))             # h1 / h2
    live += 6 * _vmem_tile_bytes((K, tile_b))    # stat/kd/qk/softmax/x temps
    vmem_limit = int(min(40 << 20, max(16 << 20, 2 * resident + 2 * live)))

    out = pl.pallas_call(
        _ncd_kernel,
        out_shape=jax.ShapeDtypeStruct((n_tiles, 1, tile_b), jnp.float32),
        grid=(n_tiles,),
        in_specs=[
            tile_spec((1, 1, tile_b)), tile_spec((1, 1, tile_b)),
            const_spec((K, S)), const_spec((2 * K + 1, E)),
            const_spec((H1, K)), const_spec((H1, 1)),
            const_spec((H2, H1)), const_spec((H2, 1)),
            const_spec((H2, 1)), const_spec((1, 1)),
        ],
        out_specs=tile_spec((1, 1, tile_b)),
        compiler_params=pltpu.CompilerParams(
            dimension_semantics=("parallel",),   # megacore-shards on v7x
            vmem_limit_bytes=vmem_limit),
    )(stu_ids, exer_ids, stu_tbl_t, ex_tbl_t, w1, b1, w2, b2, w3, b3)

    return out.reshape(-1)[:B]   # .view(-1)


def _xavier_normal(key, shape):
    fan_out, fan_in = shape
    std = (2.0 / (fan_in + fan_out)) ** 0.5
    return std * jax.random.normal(key, shape, dtype=jnp.float32)


def init_params(key, knowledge_n, exer_n, student_n, h1=128, h2=64):
    """Parameters in the torch layouts: Linear weights are (out, in)."""
    ks = jax.random.split(key, 7)
    return dict(
        ques_knowledge=_xavier_normal(ks[0], (exer_n, knowledge_n)),
        student_emb=_xavier_normal(ks[1], (student_n, knowledge_n)),
        k_difficulty=_xavier_normal(ks[2], (exer_n, knowledge_n)),
        e_difficulty=_xavier_normal(ks[3], (exer_n, 1)),
        w1=_xavier_normal(ks[4], (h1, knowledge_n)),
        b1=jnp.full((h1,), 0.01, jnp.float32),
        w2=_xavier_normal(ks[5], (h2, h1)),
        b2=jnp.full((h2,), 0.02, jnp.float32),
        w3=_xavier_normal(ks[6], (1, h2)),
        b3=jnp.full((1,), 0.03, jnp.float32),
    )


def _reference(params, stu_id, exer_id):
    """Pure-JAX reference of the PyTorch forward (eval mode)."""
    stat = jax.nn.sigmoid(params["student_emb"][stu_id])
    kd = jax.nn.sigmoid(params["k_difficulty"][exer_id])
    ed = jax.nn.sigmoid(params["e_difficulty"][exer_id])
    x = ed * (stat - kd) * jax.nn.softmax(params["ques_knowledge"][exer_id],
                                          axis=-1)
    x = jax.nn.sigmoid(x @ params["w1"].T + params["b1"])
    x = jax.nn.sigmoid(x @ params["w2"].T + params["b2"])
    return jax.nn.sigmoid(x @ params["w3"].T + params["b3"]).reshape(-1)


if __name__ == "__main__":
    knowledge_n, exer_n, student_n = 32, 64, 48
    batch = 8

    key = jax.random.PRNGKey(0)
    pkey, ik1, ik2 = jax.random.split(key, 3)
    params = init_params(pkey, knowledge_n, exer_n, student_n)

    stu_id = jax.random.randint(ik1, (batch,), 0, student_n, dtype=jnp.int32)
    exer_id = jax.random.randint(ik2, (batch,), 0, exer_n, dtype=jnp.int32)

    out = jax.block_until_ready(ncd_forward(params, stu_id, exer_id))
    ref = _reference(params, stu_id, exer_id)

    assert out.shape == (batch,)
    # Tolerance covers TPU matmul-precision differences between the MXU
    # kernel and the XLA reference (both f32 storage).
    assert jnp.allclose(out, ref, atol=2e-3, rtol=2e-3), (out, ref)

    print("KERNEL_OK")
</pallas_src>

<mosaic_0001>
module attributes {stable_mosaic.version = 11 : i64} {
  func.func @_ncd_kernel(%arg0: i32, %arg1: memref<1x1x128xi32, #tpu.memory_space<vmem>>, %arg2: memref<1x1x128xi32, #tpu.memory_space<vmem>>, %arg3: memref<32x48xf32, #tpu.memory_space<vmem>>, %arg4: memref<65x64xf32, #tpu.memory_space<vmem>>, %arg5: memref<128x32xf32, #tpu.memory_space<vmem>>, %arg6: memref<128x1xf32, #tpu.memory_space<vmem>>, %arg7: memref<64x128xf32, #tpu.memory_space<vmem>>, %arg8: memref<64x1xf32, #tpu.memory_space<vmem>>, %arg9: memref<64x1xf32, #tpu.memory_space<vmem>>, %arg10: memref<1x1xf32, #tpu.memory_space<vmem>>, %arg11: memref<1x1x128xf32, #tpu.memory_space<vmem>>) attributes {dimension_semantics = [#tpu.dimension_semantics<parallel>], iteration_bounds = array<i64: 1>, scalar_prefetch = 0 : i64, scratch_operands = 0 : i64, tpu.core_type = #tpu.core_type<tc>, window_params = [{transform_indices = @transform_0, window_bounds = array<i64: 1, 1, 128>}, {transform_indices = @transform_1, window_bounds = array<i64: 1, 1, 128>}, {pipeline_mode = #tpu.pipeline_mode<synchronous>, transform_indices = @transform_2, window_bounds = array<i64: 32, 48>}, {pipeline_mode = #tpu.pipeline_mode<synchronous>, transform_indices = @transform_3, window_bounds = array<i64: 65, 64>}, {pipeline_mode = #tpu.pipeline_mode<synchronous>, transform_indices = @transform_4, window_bounds = array<i64: 128, 32>}, {pipeline_mode = #tpu.pipeline_mode<synchronous>, transform_indices = @transform_5, window_bounds = array<i64: 128, 1>}, {pipeline_mode = #tpu.pipeline_mode<synchronous>, transform_indices = @transform_6, window_bounds = array<i64: 64, 128>}, {pipeline_mode = #tpu.pipeline_mode<synchronous>, transform_indices = @transform_7, window_bounds = array<i64: 64, 1>}, {pipeline_mode = #tpu.pipeline_mode<synchronous>, transform_indices = @transform_8, window_bounds = array<i64: 64, 1>}, {pipeline_mode = #tpu.pipeline_mode<synchronous>, transform_indices = @transform_9, window_bounds = array<i64: 1, 1>}, {transform_indices = @transform_10, window_bounds = array<i64: 1, 1, 128>}]} {
    %c0 = arith.constant 0 : index
    %c0_0 = arith.constant 0 : index
    %c0_1 = arith.constant 0 : index
    %0 = vector.load %arg1[%c0, %c0_0, %c0_1] : memref<1x1x128xi32, #tpu.memory_space<vmem>>, vector<1x1x128xi32>
    %1 = vector.shape_cast %0 : vector<1x1x128xi32> to vector<1x128xi32>
    %c0_2 = arith.constant 0 : index
    %c0_3 = arith.constant 0 : index
    %c0_4 = arith.constant 0 : index
    %2 = vector.load %arg2[%c0_2, %c0_3, %c0_4] : memref<1x1x128xi32, #tpu.memory_space<vmem>>, vector<1x1x128xi32>
    %3 = vector.shape_cast %2 : vector<1x1x128xi32> to vector<1x128xi32>
    %4 = tpu.iota {dimensions = array<i32: 0>} : vector<48x128xi32>
    %5 = vector.broadcast %1 : vector<1x128xi32> to vector<48x128xi32>
    %6 = arith.cmpi eq, %4, %5 : vector<48x128xi32>
    %7 = arith.extui %6 : vector<48x128xi1> to vector<48x128xi32>
    %8 = arith.sitofp %7 : vector<48x128xi32> to vector<48x128xf32>
    %9 = tpu.iota {dimensions = array<i32: 0>} : vector<64x128xi32>
    %10 = vector.broadcast %3 : vector<1x128xi32> to vector<64x128xi32>
    %11 = arith.cmpi eq, %9, %10 : vector<64x128xi32>
    %12 = arith.extui %11 : vector<64x128xi1> to vector<64x128xi32>
    %13 = arith.sitofp %12 : vector<64x128xi32> to vector<64x128xf32>
    %c0_5 = arith.constant 0 : index
    %c0_6 = arith.constant 0 : index
    %14 = vector.load %arg3[%c0_5, %c0_6] : memref<32x48xf32, #tpu.memory_space<vmem>>, vector<32x48xf32>
    %cst = arith.constant dense<0.000000e+00> : vector<32x128xf32>
    %15 = tpu.matmul %14, %8, %cst {dimension_numbers = #tpu.dot_dimension_numbers<[1], [0], [0], [1], [0, 0, 1, 1], [], []>} : vector<32x48xf32>, vector<48x128xf32>, vector<32x128xf32> -> vector<32x128xf32>
    %c0_7 = arith.constant 0 : index
    %c0_8 = arith.constant 0 : index
    %16 = vector.load %arg4[%c0_7, %c0_8] : memref<65x64xf32, #tpu.memory_space<vmem>>, vector<65x64xf32>
    %cst_9 = arith.constant dense<0.000000e+00> : vector<65x128xf32>
    %17 = tpu.matmul %16, %13, %cst_9 {dimension_numbers = #tpu.dot_dimension_numbers<[1], [0], [0], [1], [0, 0, 1, 1], [], []>} : vector<65x64xf32>, vector<64x128xf32>, vector<65x128xf32> -> vector<65x128xf32>
    %18 = arith.negf %15 : vector<32x128xf32>
    %19 = math.exp %18 : vector<32x128xf32>
    %cst_10 = arith.constant 1.000000e+00 : f32
    %20 = vector.broadcast %cst_10 : f32 to vector<32x128xf32>
    %21 = arith.addf %20, %19 : vector<32x128xf32>
    %22 = arith.divf %20, %21 : vector<32x128xf32>
    %23 = vector.extract_strided_slice %17 {offsets = [0, 0], sizes = [32, 128], strides = [1, 1]} : vector<65x128xf32> to vector<32x128xf32>
    %24 = arith.negf %23 : vector<32x128xf32>
    %25 = math.exp %24 : vector<32x128xf32>
    %cst_11 = arith.constant 1.000000e+00 : f32
    %26 = vector.broadcast %cst_11 : f32 to vector<32x128xf32>
    %27 = arith.addf %26, %25 : vector<32x128xf32>
    %28 = arith.divf %26, %27 : vector<32x128xf32>
    %29 = vector.extract_strided_slice %17 {offsets = [32, 0], sizes = [32, 128], strides = [1, 1]} : vector<65x128xf32> to vector<32x128xf32>
    %30 = vector.extract_strided_slice %17 {offsets = [64, 0], sizes = [1, 128], strides = [1, 1]} : vector<65x128xf32> to vector<1x128xf32>
    %31 = arith.negf %30 : vector<1x128xf32>
    %32 = math.exp %31 : vector<1x128xf32>
    %cst_12 = arith.constant 1.000000e+00 : f32
    %33 = vector.broadcast %cst_12 : f32 to vector<1x128xf32>
    %34 = arith.addf %33, %32 : vector<1x128xf32>
    %35 = arith.divf %33, %34 : vector<1x128xf32>
    %cst_13 = arith.constant dense<0xFF800000> : vector<128xf32>
    %36 = vector.multi_reduction <maximumf>, %29, %cst_13 [0] : vector<32x128xf32> to vector<128xf32>
    %37 = vector.shape_cast %36 : vector<128xf32> to vector<1x128xf32>
    %38 = vector.broadcast %37 : vector<1x128xf32> to vector<32x128xf32>
    %39 = arith.subf %29, %38 : vector<32x128xf32>
    %40 = math.exp %39 : vector<32x128xf32>
    %cst_14 = arith.constant dense<0.000000e+00> : vector<128xf32>
    %41 = vector.multi_reduction <add>, %40, %cst_14 [0] : vector<32x128xf32> to vector<128xf32>
    %42 = vector.shape_cast %41 : vector<128xf32> to vector<1x128xf32>
    %43 = vector.broadcast %42 : vector<1x128xf32> to vector<32x128xf32>
    %44 = arith.divf %40, %43 : vector<32x128xf32>
    %45 = arith.subf %22, %28 : vector<32x128xf32>
    %46 = vector.broadcast %35 : vector<1x128xf32> to vector<32x128xf32>
    %47 = arith.mulf %46, %45 : vector<32x128xf32>
    %48 = arith.mulf %47, %44 : vector<32x128xf32>
    %c0_15 = arith.constant 0 : index
    %c0_16 = arith.constant 0 : index
    %49 = vector.load %arg5[%c0_15, %c0_16] : memref<128x32xf32, #tpu.memory_space<vmem>>, vector<128x32xf32>
    %cst_17 = arith.constant dense<0.000000e+00> : vector<128x128xf32>
    %50 = tpu.matmul %49, %48, %cst_17 {dimension_numbers = #tpu.dot_dimension_numbers<[1], [0], [0], [1], [0, 0, 1, 1], [], []>} : vector<128x32xf32>, vector<32x128xf32>, vector<128x128xf32> -> vector<128x128xf32>
    %c0_18 = arith.constant 0 : index
    %c0_19 = arith.constant 0 : index
    %51 = vector.load %arg6[%c0_18, %c0_19] : memref<128x1xf32, #tpu.memory_space<vmem>>, vector<128x1xf32>
    %52 = vector.broadcast %51 : vector<128x1xf32> to vector<128x128xf32>
    %53 = arith.addf %50, %52 : vector<128x128xf32>
    %54 = arith.negf %53 : vector<128x128xf32>
    %55 = math.exp %54 : vector<128x128xf32>
    %cst_20 = arith.constant 1.000000e+00 : f32
    %56 = vector.broadcast %cst_20 : f32 to vector<128x128xf32>
    %57 = arith.addf %56, %55 : vector<128x128xf32>
    %58 = arith.divf %56, %57 : vector<128x128xf32>
    %c0_21 = arith.constant 0 : index
    %c0_22 = arith.constant 0 : index
    %59 = vector.load %arg7[%c0_21, %c0_22] : memref<64x128xf32, #tpu.memory_space<vmem>>, vector<64x128xf32>
    %cst_23 = arith.constant dense<0.000000e+00> : vector<64x128xf32>
    %60 = tpu.matmul %59, %58, %cst_23 {dimension_numbers = #tpu.dot_dimension_numbers<[1], [0], [0], [1], [0, 0, 1, 1], [], []>} : vector<64x128xf32>, vector<128x128xf32>, vector<64x128xf32> -> vector<64x128xf32>
    %c0_24 = arith.constant 0 : index
    %c0_25 = arith.constant 0 : index
    %61 = vector.load %arg8[%c0_24, %c0_25] : memref<64x1xf32, #tpu.memory_space<vmem>>, vector<64x1xf32>
    %62 = vector.broadcast %61 : vector<64x1xf32> to vector<64x128xf32>
    %63 = arith.addf %60, %62 : vector<64x128xf32>
    %64 = arith.negf %63 : vector<64x128xf32>
    %65 = math.exp %64 : vector<64x128xf32>
    %cst_26 = arith.constant 1.000000e+00 : f32
    %66 = vector.broadcast %cst_26 : f32 to vector<64x128xf32>
    %67 = arith.addf %66, %65 : vector<64x128xf32>
    %68 = arith.divf %66, %67 : vector<64x128xf32>
    %c0_27 = arith.constant 0 : index
    %c0_28 = arith.constant 0 : index
    %69 = vector.load %arg9[%c0_27, %c0_28] : memref<64x1xf32, #tpu.memory_space<vmem>>, vector<64x1xf32>
    %70 = vector.broadcast %69 : vector<64x1xf32> to vector<64x128xf32>
    %71 = arith.mulf %68, %70 : vector<64x128xf32>
    %cst_29 = arith.constant dense<0.000000e+00> : vector<128xf32>
    %72 = vector.multi_reduction <add>, %71, %cst_29 [0] : vector<64x128xf32> to vector<128xf32>
    %73 = vector.shape_cast %72 : vector<128xf32> to vector<1x128xf32>
    %c0_30 = arith.constant 0 : index
    %c0_31 = arith.constant 0 : index
    %74 = vector.load %arg10[%c0_30, %c0_31] : memref<1x1xf32, #tpu.memory_space<vmem>>, vector<1x1xf32>
    %75 = vector.broadcast %74 : vector<1x1xf32> to vector<1x128xf32>
    %76 = arith.addf %73, %75 : vector<1x128xf32>
    %77 = arith.negf %76 : vector<1x128xf32>
    %78 = math.exp %77 : vector<1x128xf32>
    %cst_32 = arith.constant 1.000000e+00 : f32
    %79 = vector.broadcast %cst_32 : f32 to vector<1x128xf32>
    %80 = arith.addf %79, %78 : vector<1x128xf32>
    %81 = arith.divf %79, %80 : vector<1x128xf32>
    %c0_33 = arith.constant 0 : index
    %c0_34 = arith.constant 0 : index
    %c0_35 = arith.constant 0 : index
    %82 = vector.load %arg11[%c0_33, %c0_34, %c0_35] : memref<1x1x128xf32, #tpu.memory_space<vmem>>, vector<1x1x128xf32>
    %83 = vector.shape_cast %82 : vector<1x1x128xf32> to vector<1x128xf32>
    %84 = vector.shape_cast %81 : vector<1x128xf32> to vector<1x1x128xf32>
    tpu.vector_store %arg11[%c0_33, %c0_34, %c0_35], %84 {strides = array<i32>} : memref<1x1x128xf32, #tpu.memory_space<vmem>>, vector<1x1x128xf32>,
    return
  }
  func.func @transform_0(%arg0: i32) -> (i32, i32, i32) {
    %c0_i32 = arith.constant 0 : i32
    %c0_i32_0 = arith.constant 0 : i32
    %c0_i32_1 = arith.constant 0 : i32
    return %arg0, %c0_i32, %c0_i32_0 : i32, i32, i32
  }
  func.func @transform_1(%arg0: i32) -> (i32, i32, i32) {
    %c0_i32 = arith.constant 0 : i32
    %c0_i32_0 = arith.constant 0 : i32
    %c0_i32_1 = arith.constant 0 : i32
    return %arg0, %c0_i32, %c0_i32_0 : i32, i32, i32
  }
  func.func @transform_2(%arg0: i32) -> (i32, i32) {
    %c0_i32 = arith.constant 0 : i32
    %c0_i32_0 = arith.constant 0 : i32
    %c0_i32_1 = arith.constant 0 : i32
    return %c0_i32, %c0_i32_0 : i32, i32
  }
  func.func @transform_3(%arg0: i32) -> (i32, i32) {
    %c0_i32 = arith.constant 0 : i32
    %c0_i32_0 = arith.constant 0 : i32
    %c0_i32_1 = arith.constant 0 : i32
    return %c0_i32, %c0_i32_0 : i32, i32
  }
  func.func @transform_4(%arg0: i32) -> (i32, i32) {
    %c0_i32 = arith.constant 0 : i32
    %c0_i32_0 = arith.constant 0 : i32
    %c0_i32_1 = arith.constant 0 : i32
    return %c0_i32, %c0_i32_0 : i32, i32
  }
  func.func @transform_5(%arg0: i32) -> (i32, i32) {
    %c0_i32 = arith.constant 0 : i32
    %c0_i32_0 = arith.constant 0 : i32
    %c0_i32_1 = arith.constant 0 : i32
    return %c0_i32, %c0_i32_0 : i32, i32
  }
  func.func @transform_6(%arg0: i32) -> (i32, i32) {
    %c0_i32 = arith.constant 0 : i32
    %c0_i32_0 = arith.constant 0 : i32
    %c0_i32_1 = arith.constant 0 : i32
    return %c0_i32, %c0_i32_0 : i32, i32
  }
  func.func @transform_7(%arg0: i32) -> (i32, i32) {
    %c0_i32 = arith.constant 0 : i32
    %c0_i32_0 = arith.constant 0 : i32
    %c0_i32_1 = arith.constant 0 : i32
    return %c0_i32, %c0_i32_0 : i32, i32
  }
  func.func @transform_8(%arg0: i32) -> (i32, i32) {
    %c0_i32 = arith.constant 0 : i32
    %c0_i32_0 = arith.constant 0 : i32
    %c0_i32_1 = arith.constant 0 : i32
    return %c0_i32, %c0_i32_0 : i32, i32
  }
  func.func @transform_9(%arg0: i32) -> (i32, i32) {
    %c0_i32 = arith.constant 0 : i32
    %c0_i32_0 = arith.constant 0 : i32
    %c0_i32_1 = arith.constant 0 : i32
    return %c0_i32, %c0_i32_0 : i32, i32
  }
  func.func @transform_10(%arg0: i32) -> (i32, i32, i32) {
    %c0_i32 = arith.constant 0 : i32
    %c0_i32_0 = arith.constant 0 : i32
    %c0_i32_1 = arith.constant 0 : i32
    return %arg0, %c0_i32, %c0_i32_0 : i32, i32, i32
  }
}

</mosaic_0001>

<llo_original>
// kernel: ncd_forward.1
$region0: #{ncd_forward.1}
  #allocation0 [shape = 'u32[]', space=smem, size = 0x4, offset = 0x4, fixed_abs, tag = 'smem constant byte address 0x4 - core index']
  #allocation1 [shape = 'u32[144,128]{1,0:T(1,128)}', space=vmem, size = 0x12000, scoped, tag = 'internal scratch']
  #allocation2 [shape = 'f32[1,1]{1,0:T(1,128)S(1)}', space=vmem, size = 0x200, scoped, tag = 'scoped memory for ncd_forward.1']
  %s0 = inlined_call_operand.vmem [shape: s32[1,1,128], index: 0, kind: input, shape index: {}]
  %s1 = inlined_call_operand.vmem [shape: s32[1,1,128], index: 1, kind: input, shape index: {}]
  %s2 = inlined_call_operand.vmem [shape: f32[32,48], index: 2, kind: input, shape index: {}]
  %s3 = inlined_call_operand.vmem [shape: f32[65,64], index: 3, kind: input, shape index: {}]
  %s4 = inlined_call_operand.vmem [shape: f32[128,32], index: 4, kind: input, shape index: {}]
  %s5 = inlined_call_operand.vmem [shape: f32[128,1], index: 5, kind: input, shape index: {}]
  %s6 = inlined_call_operand.vmem [shape: f32[64,128], index: 6, kind: input, shape index: {}]
  %s7 = inlined_call_operand.vmem [shape: f32[64,1], index: 7, kind: input, shape index: {}]
  %s8 = inlined_call_operand.vmem [shape: f32[64,1], index: 8, kind: input, shape index: {}]
  %s9 = inlined_call_operand.<no memory space> [shape: f32[1,1], index: 9, kind: input, shape index: {}]
  %s10 = inlined_call_operand.vmem [shape: f32[1,1,128], index: 10, kind: output, shape index: {}]
  %s11 = sld [smem:[#allocation0]]
  $region50: #{ncd_forward.1} parent=0
    _
  %s13 = ssub.s32 1, %s11
  %s14 = scalar_select 0, %s13, %s11
  %v15 = vstv %s9
  %16 = vst [vmem:[#allocation2] sm:$0x1] %v15
  // Predicated region
  $region2: #{ncd_forward.1} parent=0 // pred_check
    _
  $region3: #{ncd_forward.1} parent=0 // pred_check_branch
    %18 = sbr.rel (0) target = $region5
  $region4: #{ncd_forward.1} parent=0 // pred_region
    _
  $region5: #{ncd_forward.1} parent=0 // pred_fallthru
    _
  // Predicated region
  $region6: #{ncd_forward.1} parent=0 // pred_check
    _
  $region7: #{ncd_forward.1} parent=0 // pred_check_branch
    %20 = sbr.rel (0) target = $region9
  $region8: #{ncd_forward.1} parent=0 // pred_region
    _
  $region9: #{ncd_forward.1} parent=0 // pred_fallthru
    _
  // Predicated region
  $region10: #{ncd_forward.1} parent=0 // pred_check
    _
  $region11: #{ncd_forward.1} parent=0 // pred_check_branch
    %22 = sbr.rel (0) target = $region13
  $region12: #{ncd_forward.1} parent=0 // pred_region
    _
  $region13: #{ncd_forward.1} parent=0 // pred_fallthru
    _
  // Predicated region
  $region14: #{ncd_forward.1} parent=0 // pred_check
    _
  $region15: #{ncd_forward.1} parent=0 // pred_check_branch
    %24 = sbr.rel (0) target = $region17
  $region16: #{ncd_forward.1} parent=0 // pred_region
    _
  $region17: #{ncd_forward.1} parent=0 // pred_fallthru
    _
  // Predicated region
  $region18: #{ncd_forward.1} parent=0 // pred_check
    _
  $region19: #{ncd_forward.1} parent=0 // pred_check_branch
    %26 = sbr.rel (0) target = $region21
  $region20: #{ncd_forward.1} parent=0 // pred_region
    _
  $region21: #{ncd_forward.1} parent=0 // pred_fallthru
    _
  // Predicated region
  $region22: #{ncd_forward.1} parent=0 // pred_check
    _
  $region23: #{ncd_forward.1} parent=0 // pred_check_branch
    %28 = sbr.rel (0) target = $region25
  $region24: #{ncd_forward.1} parent=0 // pred_region
    _
  $region25: #{ncd_forward.1} parent=0 // pred_fallthru
    _
  // Predicated region
  $region26: #{ncd_forward.1} parent=0 // pred_check
    _
  $region27: #{ncd_forward.1} parent=0 // pred_check_branch
    %30 = sbr.rel (0) target = $region29
  $region28: #{ncd_forward.1} parent=0 // pred_region
    _
  $region29: #{ncd_forward.1} parent=0 // pred_fallthru
    _
  // Predicated region
  $region30: #{ncd_forward.1} parent=0 // pred_check
    _
  $region31: #{ncd_forward.1} parent=0 // pred_check_branch
    %32 = sbr.rel (0) target = $region33
  $region32: #{ncd_forward.1} parent=0 // pred_region
    _
  $region33: #{ncd_forward.1} parent=0 // pred_fallthru
    _
  // Predicated region
  $region34: #{ncd_forward.1} parent=0 // pred_check
    _
  $region35: #{ncd_forward.1} parent=0 // pred_check_branch
    %34 = sbr.rel (0) target = $region37
  $region36: #{ncd_forward.1} parent=0 // pred_region
    _
  $region37: #{ncd_forward.1} parent=0 // pred_fallthru
    _
  // Predicated region
  $region38: #{ncd_forward.1} parent=0 // pred_check
    _
  $region39: #{ncd_forward.1} parent=0 // pred_check_branch
    %36 = sbr.rel (0) target = $region41
  $region40: #{ncd_forward.1} parent=0 // pred_region
    _
  $region41: #{ncd_forward.1} parent=0 // pred_fallthru
    _
  %v37 = vld [vmem:[%s0] sm:$0x1]
  %v38 = vld [vmem:[%s1] sm:$0x1]
  %v39 = vlaneseq
  %v40 = vshrl.u32 %v39, 7
  %v41 = vadd.s32 %v40, 8
  %v42 = vadd.s32 %v40, 16
  %v43 = vadd.s32 %v40, 24
  %v44 = vadd.s32 %v40, 32
  %v45 = vadd.s32 %v40, 40
  %v46 = vlaneseq
  %v47 = vshrl.u32 %v46, 7
  %v48 = vsub.s32 0, %v47
  %v49 = vrot.slane %v37, %v48
  %vm50 = vcmp.eq.s32.totalorder %v40, %v49
  %vm51 = vcmp.eq.s32.totalorder %v41, %v49
  %vm52 = vcmp.eq.s32.totalorder %v42, %v49
  %vm53 = vcmp.eq.s32.totalorder %v43, %v49
  %vm54 = vcmp.eq.s32.totalorder %v44, %v49
  %vm55 = vcmp.eq.s32.totalorder %v45, %v49
  %v56 = vsel %vm50, 1, 0
  %v57 = vsel %vm51, 1, 0
  %v58 = vsel %vm52, 1, 0
  %v59 = vsel %vm53, 1, 0
  %v60 = vsel %vm54, 1, 0
  %v61 = vsel %vm55, 1, 0
  %v62 = vcvt.s32.f32 %v56
  %v63 = vcvt.s32.f32 %v57
  %v64 = vcvt.s32.f32 %v58
  %v65 = vcvt.s32.f32 %v59
  %v66 = vcvt.s32.f32 %v60
  %v67 = vcvt.s32.f32 %v61
  %v68 = vadd.s32 %v40, 48
  %v69 = vadd.s32 %v40, 56
  %v70 = vlaneseq
  %v71 = vshrl.u32 %v70, 7
  %v72 = vsub.s32 0, %v71
  %v73 = vrot.slane %v38, %v72
  %vm74 = vcmp.eq.s32.totalorder %v40, %v73
  %vm75 = vcmp.eq.s32.totalorder %v41, %v73
  %vm76 = vcmp.eq.s32.totalorder %v42, %v73
  %vm77 = vcmp.eq.s32.totalorder %v43, %v73
  %vm78 = vcmp.eq.s32.totalorder %v44, %v73
  %vm79 = vcmp.eq.s32.totalorder %v45, %v73
  %vm80 = vcmp.eq.s32.totalorder %v68, %v73
  %vm81 = vcmp.eq.s32.totalorder %v69, %v73
  %v82 = vsel %vm74, 1, 0
  %v83 = vsel %vm75, 1, 0
  %v84 = vsel %vm76, 1, 0
  %v85 = vsel %vm77, 1, 0
  %v86 = vsel %vm78, 1, 0
  %v87 = vsel %vm79, 1, 0
  %v88 = vsel %vm80, 1, 0
  %v89 = vsel %vm81, 1, 0
  %v90 = vcvt.s32.f32 %v82
  %v91 = vcvt.s32.f32 %v83
  %v92 = vcvt.s32.f32 %v84
  %v93 = vcvt.s32.f32 %v85
  %v94 = vcvt.s32.f32 %v86
  %v95 = vcvt.s32.f32 %v87
  %v96 = vcvt.s32.f32 %v88
  %v97 = vcvt.s32.f32 %v89
  %v98 = vld [vmem:[%s2] sm:$0xff]
  %v99 = vld [vmem:[%s2 + $0x8] sm:$0xff]
  %v100 = vld [vmem:[%s2 + $0x10] sm:$0xff]
  %v101 = vld [vmem:[%s2 + $0x18] sm:$0xff]
  %vm102 = vcmask 392192
  %v104 = vsel %vm102, %v98, 0
  %v107 = vsel %vm102, %v99, 0
  %v110 = vsel %vm102, %v100, 0
  %v113 = vsel %vm102, %v101, 0
  %115 = vmatprep.subr.mxu0 0.0
  %116 = vmatpush1.msra.mxu0 %v62
  %117 = vmatprep.subr.mxu0 0.0
  %118 = vmatpush1.msra.mxu0 %v63
  %119 = vmatprep.subr.mxu0 0.0
  %120 = vmatpush1.msra.mxu0 %v64
  %121 = vmatprep.subr.mxu0 0.0
  %122 = vmatpush1.msra.mxu0 %v65
  %123 = vmatprep.subr.mxu0 0.0
  %124 = vmatpush1.msra.mxu0 %v66
  %125 = vmatprep.subr.mxu0 0.0
  %126 = vmatpush1.msra.mxu0 %v67
  %127 = vmatprep.subr.mxu0 0.0
  %128 = vmatpush1.msra.mxu0 0.0
  %129 = vmatprep.subr.mxu0 0.0
  %130 = vmatpush1.msra.mxu0 0.0
  %131 = vmatprep.subr.mxu0 0.0
  %132 = vmatpush1.msra.mxu0 0.0
  %133 = vmatprep.subr.mxu0 0.0
  %134 = vmatpush1.msra.mxu0 0.0
  %135 = vmatprep.subr.mxu0 0.0
  %136 = vmatpush1.msra.mxu0 0.0
  %137 = vmatprep.subr.mxu0 0.0
  %138 = vmatpush1.msra.mxu0 0.0
  %139 = vmatprep.subr.mxu0 0.0
  %140 = vmatpush1.msra.mxu0 0.0
  %141 = vmatprep.subr.mxu0 0.0
  %142 = vmatpush1.msra.mxu0 0.0
  %143 = vmatprep.subr.mxu0 0.0
  %144 = vmatpush1.msra.mxu0 0.0
  %145 = vmatprep.subr.mxu0 0.0
  %146 = vmatpush1.msra.mxu0 0.0
  %147 = vmatprep.subr.mxu0 0.0
  %148 = vmatpush1.msra.mxu0 0.0
  %149 = vmatprep.subr.mxu0 0.0
  %150 = vmatpush1.msra.mxu0 0.0
  %151 = vmatprep.subr.mxu0 0.0
  %152 = vmatpush1.msra.mxu0 0.0
  %153 = vmatprep.subr.mxu0 0.0
  %154 = vmatpush1.msra.mxu0 0.0
  %155 = vmatprep.subr.mxu0 0.0
  %156 = vmatpush1.msra.mxu0 0.0
  %157 = vmatprep.subr.mxu0 0.0
  %158 = vmatpush1.msra.mxu0 0.0
  %159 = vmatprep.subr.mxu0 0.0
  %160 = vmatpush1.msra.mxu0 0.0
  %161 = vmatprep.subr.mxu0 0.0
  %162 = vmatpush1.msra.mxu0 0.0
  %163 = vmatprep.subr.mxu0 0.0
  %164 = vmatpush1.msra.mxu0 0.0
  %165 = vmatprep.subr.mxu0 0.0
  %166 = vmatpush1.msra.mxu0 0.0
  %167 = vmatprep.subr.mxu0 0.0
  %168 = vmatpush1.msra.mxu0 0.0
  %169 = vmatprep.subr.mxu0 0.0
  %170 = vmatpush1.msra.mxu0 0.0
  %171 = vmatprep.subr.mxu0 0.0
  %172 = vmatpush1.msra.mxu0 0.0
  %173 = vmatprep.subr.mxu0 0.0
  %174 = vmatpush1.msra.mxu0 0.0
  %175 = vmatprep.subr.mxu0 0.0
  %176 = vmatpush1.msra.mxu0 0.0
  %177 = vmatprep.subr.mxu0 0.0
  %178 = vmatpush1.msra.mxu0 0.0
  %179 = vmatprep.mubr.f32.mxu0 0.0
  %180 = vmatmul.mubr.f32.gmra.mrb[0].mxu0 %v104
  %v181 = vpop.f32.mrb[0].mxu0
  %v182 = vadd.f32 0.0, %v181
  %v183 = vpop.f32.mrb[0].mxu0
  %184 = vmatprep.mubr.f32.mxu0 0.0
  %185 = vmatmul.mubr.f32.gmra.mrb[0].mxu0 %v107
  %v186 = vpop.f32.mrb[0].mxu0
  %v187 = vadd.f32 0.0, %v186
  %v188 = vpop.f32.mrb[0].mxu0
  %189 = vmatprep.mubr.f32.mxu0 0.0
  %190 = vmatmul.mubr.f32.gmra.mrb[0].mxu0 %v110
  %v191 = vpop.f32.mrb[0].mxu0
  %v192 = vadd.f32 0.0, %v191
  %v193 = vpop.f32.mrb[0].mxu0
  %194 = vmatprep.mubr.f32.mxu0 0.0
  %195 = vmatmul.mubr.f32.gmra.mrb[0].mxu0 %v113
  %v196 = vpop.f32.mrb[0].mxu0
  %v197 = vadd.f32 0.0, %v196
  %v198 = vpop.f32.mrb[0].mxu0
  %199 = vdwg.mxu0
  %v200 = vld [vmem:[%s3] sm:$0xff]
  %v201 = vld [vmem:[%s3 + $0x8] sm:$0xff]
  %v202 = vld [vmem:[%s3 + $0x10] sm:$0xff]
  %v203 = vld [vmem:[%s3 + $0x18] sm:$0xff]
  %v204 = vld [vmem:[%s3 + $0x20] sm:$0xff]
  %v205 = vld [vmem:[%s3 + $0x28] sm:$0xff]
  %v206 = vld [vmem:[%s3 + $0x30] sm:$0xff]
  %v207 = vld [vmem:[%s3 + $0x38] sm:$0xff]
  %v208 = vld [vmem:[%s3 + $0x40] sm:$0x1]
  %vm209 = vcmask 523264
  %v211 = vsel %vm209, %v200, 0
  %v214 = vsel %vm209, %v201, 0
  %v217 = vsel %vm209, %v202, 0
  %v220 = vsel %vm209, %v203, 0
  %v223 = vsel %vm209, %v204, 0
  %v226 = vsel %vm209, %v205, 0
  %v229 = vsel %vm209, %v206, 0
  %v232 = vsel %vm209, %v207, 0
  %v235 = vsel %vm209, %v208, 0
  %237 = vmatprep.subr.mxu0 0.0
  %238 = vmatpush1.msra.mxu0 %v90
  %239 = vmatprep.subr.mxu0 0.0
  %240 = vmatpush1.msra.mxu0 %v91
  %241 = vmatprep.subr.mxu0 0.0
  %242 = vmatpush1.msra.mxu0 %v92
  %243 = vmatprep.subr.mxu0 0.0
  %244 = vmatpush1.msra.mxu0 %v93
  %245 = vmatprep.subr.mxu0 0.0
  %246 = vmatpush1.msra.mxu0 %v94
  %247 = vmatprep.subr.mxu0 0.0
  %248 = vmatpush1.msra.mxu0 %v95
  %249 = vmatprep.subr.mxu0 0.0
  %250 = vmatpush1.msra.mxu0 %v96
  %251 = vmatprep.subr.mxu0 0.0
  %252 = vmatpush1.msra.mxu0 %v97
  %253 = vmatprep.subr.mxu0 0.0
  %254 = vmatpush1.msra.mxu0 0.0
  %255 = vmatprep.subr.mxu0 0.0
  %256 = vmatpush1.msra.mxu0 0.0
  %257 = vmatprep.subr.mxu0 0.0
  %258 = vmatpush1.msra.mxu0 0.0
  %259 = vmatprep.subr.mxu0 0.0
  %260 = vmatpush1.msra.mxu0 0.0
  %261 = vmatprep.subr.mxu0 0.0
  %262 = vmatpush1.msra.mxu0 0.0
  %263 = vmatprep.subr.mxu0 0.0
  %264 = vmatpush1.msra.mxu0 0.0
  %265 = vmatprep.subr.mxu0 0.0
  %266 = vmatpush1.msra.mxu0 0.0
  %267 = vmatprep.subr.mxu0 0.0
  %268 = vmatpush1.msra.mxu0 0.0
  %269 = vmatprep.subr.mxu0 0.0
  %270 = vmatpush1.msra.mxu0 0.0
  %271 = vmatprep.subr.mxu0 0.0
  %272 = vmatpush1.msra.mxu0 0.0
  %273 = vmatprep.subr.mxu0 0.0
  %274 = vmatpush1.msra.mxu0 0.0
  %275 = vmatprep.subr.mxu0 0.0
  %276 = vmatpush1.msra.mxu0 0.0
  %277 = vmatprep.subr.mxu0 0.0
  %278 = vmatpush1.msra.mxu0 0.0
  %279 = vmatprep.subr.mxu0 0.0
  %280 = vmatpush1.msra.mxu0 0.0
  %281 = vmatprep.subr.mxu0 0.0
  %282 = vmatpush1.msra.mxu0 0.0
  %283 = vmatprep.subr.mxu0 0.0
  %284 = vmatpush1.msra.mxu0 0.0
  %285 = vmatprep.subr.mxu0 0.0
  %286 = vmatpush1.msra.mxu0 0.0
  %287 = vmatprep.subr.mxu0 0.0
  %288 = vmatpush1.msra.mxu0 0.0
  %289 = vmatprep.subr.mxu0 0.0
  %290 = vmatpush1.msra.mxu0 0.0
  %291 = vmatprep.subr.mxu0 0.0
  %292 = vmatpush1.msra.mxu0 0.0
  %293 = vmatprep.subr.mxu0 0.0
  %294 = vmatpush1.msra.mxu0 0.0
  %295 = vmatprep.subr.mxu0 0.0
  %296 = vmatpush1.msra.mxu0 0.0
  %297 = vmatprep.subr.mxu0 0.0
  %298 = vmatpush1.msra.mxu0 0.0
  %299 = vmatprep.subr.mxu0 0.0
  %300 = vmatpush1.msra.mxu0 0.0
  %301 = vmatprep.mubr.f32.mxu0 0.0
  %302 = vmatmul.mubr.f32.gmra.mrb[0].mxu0 %v211
  %v303 = vpop.f32.mrb[0].mxu0
  %v304 = vadd.f32 0.0, %v303
  %v305 = vpop.f32.mrb[0].mxu0
  %306 = vmatprep.mubr.f32.mxu0 0.0
  %307 = vmatmul.mubr.f32.gmra.mrb[0].mxu0 %v214
  %v308 = vpop.f32.mrb[0].mxu0
  %v309 = vadd.f32 0.0, %v308
  %v310 = vpop.f32.mrb[0].mxu0
  %311 = vmatprep.mubr.f32.mxu0 0.0
  %312 = vmatmul.mubr.f32.gmra.mrb[0].mxu0 %v217
  %v313 = vpop.f32.mrb[0].mxu0
  %v314 = vadd.f32 0.0, %v313
  %v315 = vpop.f32.mrb[0].mxu0
  %316 = vmatprep.mubr.f32.mxu0 0.0
  %317 = vmatmul.mubr.f32.gmra.mrb[0].mxu0 %v220
  %v318 = vpop.f32.mrb[0].mxu0
  %v319 = vadd.f32 0.0, %v318
  %v320 = vpop.f32.mrb[0].mxu0
  %321 = vmatprep.mubr.f32.mxu0 0.0
  %322 = vmatmul.mubr.f32.gmra.mrb[0].mxu0 %v223
  %v323 = vpop.f32.mrb[0].mxu0
  %v324 = vadd.f32 0.0, %v323
  %v325 = vpop.f32.mrb[0].mxu0
  %326 = vmatprep.mubr.f32.mxu0 0.0
  %327 = vmatmul.mubr.f32.gmra.mrb[0].mxu0 %v226
  %v328 = vpop.f32.mrb[0].mxu0
  %v329 = vadd.f32 0.0, %v328
  %v330 = vpop.f32.mrb[0].mxu0
  %331 = vmatprep.mubr.f32.mxu0 0.0
  %332 = vmatmul.mubr.f32.gmra.mrb[0].mxu0 %v229
  %v333 = vpop.f32.mrb[0].mxu0
  %v334 = vadd.f32 0.0, %v333
  %v335 = vpop.f32.mrb[0].mxu0
  %336 = vmatprep.mubr.f32.mxu0 0.0
  %337 = vmatmul.mubr.f32.gmra.mrb[0].mxu0 %v232
  %v338 = vpop.f32.mrb[0].mxu0
  %v339 = vadd.f32 0.0, %v338
  %v340 = vpop.f32.mrb[0].mxu0
  %341 = vmatprep.mubr.f32.mxu0 0.0
  %342 = vmatmul.mubr.f32.gmra.mrb[0].mxu0 %v235
  %v343 = vpop.f32.mrb[0].mxu0
  %v344 = vadd.f32 0.0, %v343
  %v345 = vpop.f32.mrb[0].mxu0
  %346 = vdwg.mxu0
  %v347 = vxor.u32 %v182, 2147483648
  %v348 = vxor.u32 %v187, 2147483648
  %v349 = vxor.u32 %v192, 2147483648
  %v350 = vxor.u32 %v197, 2147483648
  %v351 = vmul.f32 %v347, 1.442695
  %v352 = vpow.pop %v351
  %v353 = vmul.f32 %v348, 1.442695
  %v354 = vpow.pop %v353
  %v355 = vmul.f32 %v349, 1.442695
  %v356 = vpow.pop %v355
  %v357 = vmul.f32 %v350, 1.442695
  %v358 = vpow.pop %v357
  %v359 = vadd.f32 %v352, 1.0
  %v360 = vadd.f32 %v354, 1.0
  %v361 = vadd.f32 %v356, 1.0
  %v362 = vadd.f32 %v358, 1.0
  %v363 = vrcp.pop %v359
  %v364 = vmul.f32 1.0, %v363
  %v365 = vrcp.pop %v360
  %v366 = vmul.f32 1.0, %v365
  %v367 = vrcp.pop %v361
  %v368 = vmul.f32 1.0, %v367
  %v369 = vrcp.pop %v362
  %v370 = vmul.f32 1.0, %v369
  %v371 = vxor.u32 %v304, 2147483648
  %v372 = vxor.u32 %v309, 2147483648
  %v373 = vxor.u32 %v314, 2147483648
  %v374 = vxor.u32 %v319, 2147483648
  %v375 = vmul.f32 %v371, 1.442695
  %v376 = vpow.pop %v375
  %v377 = vmul.f32 %v372, 1.442695
  %v378 = vpow.pop %v377
  %v379 = vmul.f32 %v373, 1.442695
  %v380 = vpow.pop %v379
  %v381 = vmul.f32 %v374, 1.442695
  %v382 = vpow.pop %v381
  %v383 = vadd.f32 %v376, 1.0
  %v384 = vadd.f32 %v378, 1.0
  %v385 = vadd.f32 %v380, 1.0
  %v386 = vadd.f32 %v382, 1.0
  %v387 = vrcp.pop %v383
  %v388 = vmul.f32 1.0, %v387
  %v389 = vrcp.pop %v384
  %v390 = vmul.f32 1.0, %v389
  %v391 = vrcp.pop %v385
  %v392 = vmul.f32 1.0, %v391
  %v393 = vrcp.pop %v386
  %v394 = vmul.f32 1.0, %v393
  %v395 = vxor.u32 %v344, 2147483648
  %v396 = vmul.f32 %v395, 1.442695
  %v397 = vpow.pop %v396
  %v398 = vadd.f32 %v397, 1.0
  %v399 = vrcp.pop %v398
  %v400 = vmul.f32 1.0, %v399
  %v401 = vmax.f32 %v324, %v329
  %v402 = vmax.f32 %v334, %v339
  %v403 = vmax.f32 %v401, %v402
  %v404 = vrot.slane %v403, 4
  %v405 = vmax.f32 %v403, %v404
  %v406 = vrot.slane %v405, 2
  %v407 = vmax.f32 %v405, %v406
  %v408 = vrot.slane %v407, 1
  %v409 = vmax.f32 %v407, %v408
  %v410 = vsub.f32 %v324, %v409
  %v411 = vsub.f32 %v329, %v409
  %v412 = vsub.f32 %v334, %v409
  %v413 = vsub.f32 %v339, %v409
  %v414 = vmul.f32 %v410, 1.442695
  %v415 = vpow.pop %v414
  %v416 = vmul.f32 %v411, 1.442695
  %v417 = vpow.pop %v416
  %v418 = vmul.f32 %v412, 1.442695
  %v419 = vpow.pop %v418
  %v420 = vmul.f32 %v413, 1.442695
  %v421 = vpow.pop %v420
  %v422 = vadd.f32 %v415, %v417
  %v423 = vadd.f32 %v422, %v419
  %v424 = vadd.f32 %v423, %v421
  %v425 = vrot.slane %v424, 4
  %v426 = vadd.f32 %v424, %v425
  %v427 = vrot.slane %v426, 2
  %v428 = vadd.f32 %v426, %v427
  %v429 = vrot.slane %v428, 1
  %v430 = vadd.f32 %v428, %v429
  %v431 = vrcp.pop %v430
  %v432 = vmul.f32 %v415, %v431
  %v433 = vmul.f32 %v417, %v431
  %v434 = vmul.f32 %v419, %v431
  %v435 = vmul.f32 %v421, %v431
  %v436 = vsub.f32 %v364, %v388
  %v437 = vsub.f32 %v366, %v390
  %v438 = vsub.f32 %v368, %v392
  %v439 = vsub.f32 %v370, %v394
  %v440 = vlaneseq
  %v441 = vshrl.u32 %v440, 7
  %v442 = vsub.s32 0, %v441
  %v443 = vrot.slane %v400, %v442
  %v444 = vmul.f32 %v443, %v436
  %v445 = vmul.f32 %v443, %v437
  %v446 = vmul.f32 %v443, %v438
  %v447 = vmul.f32 %v443, %v439
  %v448 = vmul.f32 %v444, %v432
  %v449 = vmul.f32 %v445, %v433
  %v450 = vmul.f32 %v446, %v434
  %v451 = vmul.f32 %v447, %v435
  %v452 = vld [vmem:[%s4] sm:$0xff]
  %v453 = vld [vmem:[%s4 + $0x8] sm:$0xff]
  %v454 = vld [vmem:[%s4 + $0x10] sm:$0xff]
  %v455 = vld [vmem:[%s4 + $0x18] sm:$0xff]
  %v456 = vld [vmem:[%s4 + $0x20] sm:$0xff]
  %v457 = vld [vmem:[%s4 + $0x28] sm:$0xff]
  %v458 = vld [vmem:[%s4 + $0x30] sm:$0xff]
  %v459 = vld [vmem:[%s4 + $0x38] sm:$0xff]
  %v460 = vld [vmem:[%s4 + $0x40] sm:$0xff]
  %v461 = vld [vmem:[%s4 + $0x48] sm:$0xff]
  %v462 = vld [vmem:[%s4 + $0x50] sm:$0xff]
  %v463 = vld [vmem:[%s4 + $0x58] sm:$0xff]
  %v464 = vld [vmem:[%s4 + $0x60] sm:$0xff]
  %v465 = vld [vmem:[%s4 + $0x68] sm:$0xff]
  %v466 = vld [vmem:[%s4 + $0x70] sm:$0xff]
  %v467 = vld [vmem:[%s4 + $0x78] sm:$0xff]
  %v468 = vld [vmem:[%s5] sm:$0xff]
  %v469 = vld [vmem:[%s5 + $0x8] sm:$0xff]
  %v470 = vld [vmem:[%s5 + $0x10] sm:$0xff]
  %v471 = vld [vmem:[%s5 + $0x18] sm:$0xff]
  %v472 = vld [vmem:[%s5 + $0x20] sm:$0xff]
  %v473 = vld [vmem:[%s5 + $0x28] sm:$0xff]
  %v474 = vld [vmem:[%s5 + $0x30] sm:$0xff]
  %v475 = vld [vmem:[%s5 + $0x38] sm:$0xff]
  %v476 = vld [vmem:[%s5 + $0x40] sm:$0xff]
  %v477 = vld [vmem:[%s5 + $0x48] sm:$0xff]
  %v478 = vld [vmem:[%s5 + $0x50] sm:$0xff]
  %v479 = vld [vmem:[%s5 + $0x58] sm:$0xff]
  %v480 = vld [vmem:[%s5 + $0x60] sm:$0xff]
  %v481 = vld [vmem:[%s5 + $0x68] sm:$0xff]
  %v482 = vld [vmem:[%s5 + $0x70] sm:$0xff]
  %v483 = vld [vmem:[%s5 + $0x78] sm:$0xff]
  %485 = vset.pattern.permute.xlu0 0
  %486 = vperm.xlu0 %485, %v468
  %v487 = vpop.permute.xlu0 %486
  %490 = vset.pattern.permute.xlu0 0
  %491 = vperm.xlu0 %490, %v469
  %v492 = vpop.permute.xlu0 %491
  %495 = vset.pattern.permute.xlu0 0
  %496 = vperm.xlu0 %495, %v470
  %v497 = vpop.permute.xlu0 %496
  %500 = vset.pattern.permute.xlu0 0
  %501 = vperm.xlu0 %500, %v471
  %v502 = vpop.permute.xlu0 %501
  %505 = vset.pattern.permute.xlu0 0
  %506 = vperm.xlu0 %505, %v472
  %v507 = vpop.permute.xlu0 %506
  %510 = vset.pattern.permute.xlu0 0
  %511 = vperm.xlu0 %510, %v473
  %v512 = vpop.permute.xlu0 %511
  %515 = vset.pattern.permute.xlu0 0
  %516 = vperm.xlu0 %515, %v474
  %v517 = vpop.permute.xlu0 %516
  %520 = vset.pattern.permute.xlu0 0
  %521 = vperm.xlu0 %520, %v475
  %v522 = vpop.permute.xlu0 %521
  %525 = vset.pattern.permute.xlu0 0
  %526 = vperm.xlu0 %525, %v476
  %v527 = vpop.permute.xlu0 %526
  %530 = vset.pattern.permute.xlu0 0
  %531 = vperm.xlu0 %530, %v477
  %v532 = vpop.permute.xlu0 %531
  %535 = vset.pattern.permute.xlu0 0
  %536 = vperm.xlu0 %535, %v478
  %v537 = vpop.permute.xlu0 %536
  %540 = vset.pattern.permute.xlu0 0
  %541 = vperm.xlu0 %540, %v479
  %v542 = vpop.permute.xlu0 %541
  %545 = vset.pattern.permute.xlu0 0
  %546 = vperm.xlu0 %545, %v480
  %v547 = vpop.permute.xlu0 %546
  %550 = vset.pattern.permute.xlu0 0
  %551 = vperm.xlu0 %550, %v481
  %v552 = vpop.permute.xlu0 %551
  %555 = vset.pattern.permute.xlu0 0
  %556 = vperm.xlu0 %555, %v482
  %v557 = vpop.permute.xlu0 %556
  %560 = vset.pattern.permute.xlu0 0
  %561 = vperm.xlu0 %560, %v483
  %v562 = vpop.permute.xlu0 %561
  %vm564 = vcmask 261120
  %v566 = vsel %vm564, %v452, 0
  %v569 = vsel %vm564, %v453, 0
  %v572 = vsel %vm564, %v454, 0
  %v575 = vsel %vm564, %v455, 0
  %v578 = vsel %vm564, %v456, 0
  %v581 = vsel %vm564, %v457, 0
  %v584 = vsel %vm564, %v458, 0
  %v587 = vsel %vm564, %v459, 0
  %v590 = vsel %vm564, %v460, 0
  %v593 = vsel %vm564, %v461, 0
  %v596 = vsel %vm564, %v462, 0
  %v599 = vsel %vm564, %v463, 0
  %v602 = vsel %vm564, %v464, 0
  %v605 = vsel %vm564, %v465, 0
  %v608 = vsel %vm564, %v466, 0
  %v611 = vsel %vm564, %v467, 0
  %613 = vmatprep.subr.mxu0 0.0
  %614 = vmatpush1.msra.mxu0 %v448
  %615 = vmatprep.subr.mxu0 0.0
  %616 = vmatpush1.msra.mxu0 %v449
  %617 = vmatprep.subr.mxu0 0.0
  %618 = vmatpush1.msra.mxu0 %v450
  %619 = vmatprep.subr.mxu0 0.0
  %620 = vmatpush1.msra.mxu0 %v451
  %621 = vmatprep.subr.mxu0 0.0
  %622 = vmatpush1.msra.mxu0 0.0
  %623 = vmatprep.subr.mxu0 0.0
  %624 = vmatpush1.msra.mxu0 0.0
  %625 = vmatprep.subr.mxu0 0.0
  %626 = vmatpush1.msra.mxu0 0.0
  %627 = vmatprep.subr.mxu0 0.0
  %628 = vmatpush1.msra.mxu0 0.0
  %629 = vmatprep.subr.mxu0 0.0
  %630 = vmatpush1.msra.mxu0 0.0
  %631 = vmatprep.subr.mxu0 0.0
  %632 = vmatpush1.msra.mxu0 0.0
  %633 = vmatprep.subr.mxu0 0.0
  %634 = vmatpush1.msra.mxu0 0.0
  %635 = vmatprep.subr.mxu0 0.0
  %636 = vmatpush1.msra.mxu0 0.0
  %637 = vmatprep.subr.mxu0 0.0
  %638 = vmatpush1.msra.mxu0 0.0
  %639 = vmatprep.subr.mxu0 0.0
  %640 = vmatpush1.msra.mxu0 0.0
  %641 = vmatprep.subr.mxu0 0.0
  %642 = vmatpush1.msra.mxu0 0.0
  %643 = vmatprep.subr.mxu0 0.0
  %644 = vmatpush1.msra.mxu0 0.0
  %645 = vmatprep.subr.mxu0 0.0
  %646 = vmatpush1.msra.mxu0 0.0
  %647 = vmatprep.subr.mxu0 0.0
  %648 = vmatpush1.msra.mxu0 0.0
  %649 = vmatprep.subr.mxu0 0.0
  %650 = vmatpush1.msra.mxu0 0.0
  %651 = vmatprep.subr.mxu0 0.0
  %652 = vmatpush1.msra.mxu0 0.0
  %653 = vmatprep.subr.mxu0 0.0
  %654 = vmatpush1.msra.mxu0 0.0
  %655 = vmatprep.subr.mxu0 0.0
  %656 = vmatpush1.msra.mxu0 0.0
  %657 = vmatprep.subr.mxu0 0.0
  %658 = vmatpush1.msra.mxu0 0.0
  %659 = vmatprep.subr.mxu0 0.0
  %660 = vmatpush1.msra.mxu0 0.0
  %661 = vmatprep.subr.mxu0 0.0
  %662 = vmatpush1.msra.mxu0 0.0
  %663 = vmatprep.subr.mxu0 0.0
  %664 = vmatpush1.msra.mxu0 0.0
  %665 = vmatprep.subr.mxu0 0.0
  %666 = vmatpush1.msra.mxu0 0.0
  %667 = vmatprep.subr.mxu0 0.0
  %668 = vmatpush1.msra.mxu0 0.0
  %669 = vmatprep.subr.mxu0 0.0
  %670 = vmatpush1.msra.mxu0 0.0
  %671 = vmatprep.subr.mxu0 0.0
  %672 = vmatpush1.msra.mxu0 0.0
  %673 = vmatprep.subr.mxu0 0.0
  %674 = vmatpush1.msra.mxu0 0.0
  %675 = vmatprep.subr.mxu0 0.0
  %676 = vmatpush1.msra.mxu0 0.0
  %677 = vmatprep.mubr.f32.mxu0 0.0
  %678 = vmatmul.mubr.f32.gmra.mrb[0].mxu0 %v566
  %v679 = vpop.f32.mrb[0].mxu0
  %v680 = vadd.f32 %v487, %v679
  %v681 = vpop.f32.mrb[0].mxu0
  %682 = vmatprep.mubr.f32.mxu0 0.0
  %683 = vmatmul.mubr.f32.gmra.mrb[0].mxu0 %v569
  %v684 = vpop.f32.mrb[0].mxu0
  %v685 = vadd.f32 %v492, %v684
  %v686 = vpop.f32.mrb[0].mxu0
  %687 = vmatprep.mubr.f32.mxu0 0.0
  %688 = vmatmul.mubr.f32.gmra.mrb[0].mxu0 %v572
  %v689 = vpop.f32.mrb[0].mxu0
  %v690 = vadd.f32 %v497, %v689
  %v691 = vpop.f32.mrb[0].mxu0
  %692 = vmatprep.mubr.f32.mxu0 0.0
  %693 = vmatmul.mubr.f32.gmra.mrb[0].mxu0 %v575
  %v694 = vpop.f32.mrb[0].mxu0
  %v695 = vadd.f32 %v502, %v694
  %v696 = vpop.f32.mrb[0].mxu0
  %697 = vmatprep.mubr.f32.mxu0 0.0
  %698 = vmatmul.mubr.f32.gmra.mrb[0].mxu0 %v578
  %v699 = vpop.f32.mrb[0].mxu0
  %v700 = vadd.f32 %v507, %v699
  %v701 = vpop.f32.mrb[0].mxu0
  %702 = vmatprep.mubr.f32.mxu0 0.0
  %703 = vmatmul.mubr.f32.gmra.mrb[0].mxu0 %v581
  %v704 = vpop.f32.mrb[0].mxu0
  %v705 = vadd.f32 %v512, %v704
  %v706 = vpop.f32.mrb[0].mxu0
  %707 = vmatprep.mubr.f32.mxu0 0.0
  %708 = vmatmul.mubr.f32.gmra.mrb[0].mxu0 %v584
  %v709 = vpop.f32.mrb[0].mxu0
  %v710 = vadd.f32 %v517, %v709
  %v711 = vpop.f32.mrb[0].mxu0
  %712 = vmatprep.mubr.f32.mxu0 0.0
  %713 = vmatmul.mubr.f32.gmra.mrb[0].mxu0 %v587
  %v714 = vpop.f32.mrb[0].mxu0
  %v715 = vadd.f32 %v522, %v714
  %v716 = vpop.f32.mrb[0].mxu0
  %717 = vmatprep.mubr.f32.mxu0 0.0
  %718 = vmatmul.mubr.f32.gmra.mrb[0].mxu0 %v590
  %v719 = vpop.f32.mrb[0].mxu0
  %v720 = vadd.f32 %v527, %v719
  %v721 = vpop.f32.mrb[0].mxu0
  %722 = vmatprep.mubr.f32.mxu0 0.0
  %723 = vmatmul.mubr.f32.gmra.mrb[0].mxu0 %v593
  %v724 = vpop.f32.mrb[0].mxu0
  %v725 = vadd.f32 %v532, %v724
  %v726 = vpop.f32.mrb[0].mxu0
  %727 = vmatprep.mubr.f32.mxu0 0.0
  %728 = vmatmul.mubr.f32.gmra.mrb[0].mxu0 %v596
  %v729 = vpop.f32.mrb[0].mxu0
  %v730 = vadd.f32 %v537, %v729
  %v731 = vpop.f32.mrb[0].mxu0
  %732 = vmatprep.mubr.f32.mxu0 0.0
  %733 = vmatmul.mubr.f32.gmra.mrb[0].mxu0 %v599
  %v734 = vpop.f32.mrb[0].mxu0
  %v735 = vadd.f32 %v542, %v734
  %v736 = vpop.f32.mrb[0].mxu0
  %737 = vmatprep.mubr.f32.mxu0 0.0
  %738 = vmatmul.mubr.f32.gmra.mrb[0].mxu0 %v602
  %v739 = vpop.f32.mrb[0].mxu0
  %v740 = vadd.f32 %v547, %v739
  %v741 = vpop.f32.mrb[0].mxu0
  %742 = vmatprep.mubr.f32.mxu0 0.0
  %743 = vmatmul.mubr.f32.gmra.mrb[0].mxu0 %v605
  %v744 = vpop.f32.mrb[0].mxu0
  %v745 = vadd.f32 %v552, %v744
  %v746 = vpop.f32.mrb[0].mxu0
  %747 = vmatprep.mubr.f32.mxu0 0.0
  %748 = vmatmul.mubr.f32.gmra.mrb[0].mxu0 %v608
  %v749 = vpop.f32.mrb[0].mxu0
  %v750 = vadd.f32 %v557, %v749
  %v751 = vpop.f32.mrb[0].mxu0
  %752 = vmatprep.mubr.f32.mxu0 0.0
  %753 = vmatmul.mubr.f32.gmra.mrb[0].mxu0 %v611
  %v754 = vpop.f32.mrb[0].mxu0
  %v755 = vadd.f32 %v562, %v754
  %v756 = vpop.f32.mrb[0].mxu0
  %757 = vdwg.mxu0
  %v758 = vxor.u32 %v680, 2147483648
  %v759 = vxor.u32 %v685, 2147483648
  %v760 = vxor.u32 %v690, 2147483648
  %v761 = vxor.u32 %v695, 2147483648
  %v762 = vxor.u32 %v700, 2147483648
  %v763 = vxor.u32 %v705, 2147483648
  %v764 = vxor.u32 %v710, 2147483648
  %v765 = vxor.u32 %v715, 2147483648
  %v766 = vxor.u32 %v720, 2147483648
  %v767 = vxor.u32 %v725, 2147483648
  %v768 = vxor.u32 %v730, 2147483648
  %v769 = vxor.u32 %v735, 2147483648
  %v770 = vxor.u32 %v740, 2147483648
  %v771 = vxor.u32 %v745, 2147483648
  %v772 = vxor.u32 %v750, 2147483648
  %v773 = vxor.u32 %v755, 2147483648
  %v774 = vmul.f32 %v758, 1.442695
  %v775 = vpow.pop %v774
  %v776 = vmul.f32 %v759, 1.442695
  %v777 = vpow.pop %v776
  %v778 = vmul.f32 %v760, 1.442695
  %v779 = vpow.pop %v778
  %v780 = vmul.f32 %v761, 1.442695
  %v781 = vpow.pop %v780
  %v782 = vmul.f32 %v762, 1.442695
  %v783 = vpow.pop %v782
  %v784 = vmul.f32 %v763, 1.442695
  %v785 = vpow.pop %v784
  %v786 = vmul.f32 %v764, 1.442695
  %v787 = vpow.pop %v786
  %v788 = vmul.f32 %v765, 1.442695
  %v789 = vpow.pop %v788
  %v790 = vmul.f32 %v766, 1.442695
  %v791 = vpow.pop %v790
  %v792 = vmul.f32 %v767, 1.442695
  %v793 = vpow.pop %v792
  %v794 = vmul.f32 %v768, 1.442695
  %v795 = vpow.pop %v794
  %v796 = vmul.f32 %v769, 1.442695
  %v797 = vpow.pop %v796
  %v798 = vmul.f32 %v770, 1.442695
  %v799 = vpow.pop %v798
  %v800 = vmul.f32 %v771, 1.442695
  %v801 = vpow.pop %v800
  %v802 = vmul.f32 %v772, 1.442695
  %v803 = vpow.pop %v802
  %v804 = vmul.f32 %v773, 1.442695
  %v805 = vpow.pop %v804
  %v806 = vadd.f32 %v775, 1.0
  %v807 = vadd.f32 %v777, 1.0
  %v808 = vadd.f32 %v779, 1.0
  %v809 = vadd.f32 %v781, 1.0
  %v810 = vadd.f32 %v783, 1.0
  %v811 = vadd.f32 %v785, 1.0
  %v812 = vadd.f32 %v787, 1.0
  %v813 = vadd.f32 %v789, 1.0
  %v814 = vadd.f32 %v791, 1.0
  %v815 = vadd.f32 %v793, 1.0
  %v816 = vadd.f32 %v795, 1.0
  %v817 = vadd.f32 %v797, 1.0
  %v818 = vadd.f32 %v799, 1.0
  %v819 = vadd.f32 %v801, 1.0
  %v820 = vadd.f32 %v803, 1.0
  %v821 = vadd.f32 %v805, 1.0
  %v822 = vrcp.pop %v806
  %v823 = vmul.f32 1.0, %v822
  %v824 = vrcp.pop %v807
  %v825 = vmul.f32 1.0, %v824
  %v826 = vrcp.pop %v808
  %v827 = vmul.f32 1.0, %v826
  %v828 = vrcp.pop %v809
  %v829 = vmul.f32 1.0, %v828
  %v830 = vrcp.pop %v810
  %v831 = vmul.f32 1.0, %v830
  %v832 = vrcp.pop %v811
  %v833 = vmul.f32 1.0, %v832
  %v834 = vrcp.pop %v812
  %v835 = vmul.f32 1.0, %v834
  %v836 = vrcp.pop %v813
  %v837 = vmul.f32 1.0, %v836
  %v838 = vrcp.pop %v814
  %v839 = vmul.f32 1.0, %v838
  %v840 = vrcp.pop %v815
  %v841 = vmul.f32 1.0, %v840
  %v842 = vrcp.pop %v816
  %v843 = vmul.f32 1.0, %v842
  %v844 = vrcp.pop %v817
  %v845 = vmul.f32 1.0, %v844
  %v846 = vrcp.pop %v818
  %v847 = vmul.f32 1.0, %v846
  %v848 = vrcp.pop %v819
  %v849 = vmul.f32 1.0, %v848
  %v850 = vrcp.pop %v820
  %v851 = vmul.f32 1.0, %v850
  %v852 = vrcp.pop %v821
  %v853 = vmul.f32 1.0, %v852
  %v854 = vld [vmem:[%s6] sm:$0xff]
  %v855 = vld [vmem:[%s6 + $0x8] sm:$0xff]
  %v856 = vld [vmem:[%s6 + $0x10] sm:$0xff]
  %v857 = vld [vmem:[%s6 + $0x18] sm:$0xff]
  %v858 = vld [vmem:[%s6 + $0x20] sm:$0xff]
  %v859 = vld [vmem:[%s6 + $0x28] sm:$0xff]
  %v860 = vld [vmem:[%s6 + $0x30] sm:$0xff]
  %v861 = vld [vmem:[%s6 + $0x38] sm:$0xff]
  %v862 = vld [vmem:[%s7] sm:$0xff]
  %v863 = vld [vmem:[%s7 + $0x8] sm:$0xff]
  %v864 = vld [vmem:[%s7 + $0x10] sm:$0xff]
  %v865 = vld [vmem:[%s7 + $0x18] sm:$0xff]
  %v866 = vld [vmem:[%s7 + $0x20] sm:$0xff]
  %v867 = vld [vmem:[%s7 + $0x28] sm:$0xff]
  %v868 = vld [vmem:[%s7 + $0x30] sm:$0xff]
  %v869 = vld [vmem:[%s7 + $0x38] sm:$0xff]
  %871 = vset.pattern.permute.xlu0 0
  %872 = vperm.xlu0 %871, %v862
  %v873 = vpop.permute.xlu0 %872
  %876 = vset.pattern.permute.xlu0 0
  %877 = vperm.xlu0 %876, %v863
  %v878 = vpop.permute.xlu0 %877
  %881 = vset.pattern.permute.xlu0 0
  %882 = vperm.xlu0 %881, %v864
  %v883 = vpop.permute.xlu0 %882
  %886 = vset.pattern.permute.xlu0 0
  %887 = vperm.xlu0 %886, %v865
  %v888 = vpop.permute.xlu0 %887
  %891 = vset.pattern.permute.xlu0 0
  %892 = vperm.xlu0 %891, %v866
  %v893 = vpop.permute.xlu0 %892
  %896 = vset.pattern.permute.xlu0 0
  %897 = vperm.xlu0 %896, %v867
  %v898 = vpop.permute.xlu0 %897
  %901 = vset.pattern.permute.xlu0 0
  %902 = vperm.xlu0 %901, %v868
  %v903 = vpop.permute.xlu0 %902
  %906 = vset.pattern.permute.xlu0 0
  %907 = vperm.xlu0 %906, %v869
  %v908 = vpop.permute.xlu0 %907
  %910 = vmatprep.subr.mxu0 0.0
  %911 = vmatpush1.msra.mxu0 %v823
  %912 = vmatprep.subr.mxu0 0.0
  %913 = vmatpush1.msra.mxu0 %v825
  %914 = vmatprep.subr.mxu0 0.0
  %915 = vmatpush1.msra.mxu0 %v827
  %916 = vmatprep.subr.mxu0 0.0
  %917 = vmatpush1.msra.mxu0 %v829
  %918 = vmatprep.subr.mxu0 0.0
  %919 = vmatpush1.msra.mxu0 %v831
  %920 = vmatprep.subr.mxu0 0.0
  %921 = vmatpush1.msra.mxu0 %v833
  %922 = vmatprep.subr.mxu0 0.0
  %923 = vmatpush1.msra.mxu0 %v835
  %924 = vmatprep.subr.mxu0 0.0
  %925 = vmatpush1.msra.mxu0 %v837
  %926 = vmatprep.subr.mxu0 0.0
  %927 = vmatpush1.msra.mxu0 %v839
  %928 = vmatprep.subr.mxu0 0.0
  %929 = vmatpush1.msra.mxu0 %v841
  %930 = vmatprep.subr.mxu0 0.0
  %931 = vmatpush1.msra.mxu0 %v843
  %932 = vmatprep.subr.mxu0 0.0
  %933 = vmatpush1.msra.mxu0 %v845
  %934 = vmatprep.subr.mxu0 0.0
  %935 = vmatpush1.msra.mxu0 %v847
  %936 = vmatprep.subr.mxu0 0.0
  %937 = vmatpush1.msra.mxu0 %v849
  %938 = vmatprep.subr.mxu0 0.0
  %939 = vmatpush1.msra.mxu0 %v851
  %940 = vmatprep.subr.mxu0 0.0
  %941 = vmatpush1.msra.mxu0 %v853
  %942 = vmatprep.subr.mxu0 0.0
  %943 = vmatpush1.msra.mxu0 0.0
  %944 = vmatprep.subr.mxu0 0.0
  %945 = vmatpush1.msra.mxu0 0.0
  %946 = vmatprep.subr.mxu0 0.0
  %947 = vmatpush1.msra.mxu0 0.0
  %948 = vmatprep.subr.mxu0 0.0
  %949 = vmatpush1.msra.mxu0 0.0
  %950 = vmatprep.subr.mxu0 0.0
  %951 = vmatpush1.msra.mxu0 0.0
  %952 = vmatprep.subr.mxu0 0.0
  %953 = vmatpush1.msra.mxu0 0.0
  %954 = vmatprep.subr.mxu0 0.0
  %955 = vmatpush1.msra.mxu0 0.0
  %956 = vmatprep.subr.mxu0 0.0
  %957 = vmatpush1.msra.mxu0 0.0
  %958 = vmatprep.subr.mxu0 0.0
  %959 = vmatpush1.msra.mxu0 0.0
  %960 = vmatprep.subr.mxu0 0.0
  %961 = vmatpush1.msra.mxu0 0.0
  %962 = vmatprep.subr.mxu0 0.0
  %963 = vmatpush1.msra.mxu0 0.0
  %964 = vmatprep.subr.mxu0 0.0
  %965 = vmatpush1.msra.mxu0 0.0
  %966 = vmatprep.subr.mxu0 0.0
  %967 = vmatpush1.msra.mxu0 0.0
  %968 = vmatprep.subr.mxu0 0.0
  %969 = vmatpush1.msra.mxu0 0.0
  %970 = vmatprep.subr.mxu0 0.0
  %971 = vmatpush1.msra.mxu0 0.0
  %972 = vmatprep.subr.mxu0 0.0
  %973 = vmatpush1.msra.mxu0 0.0
  %974 = vmatprep.mubr.f32.mxu0 0.0
  %975 = vmatmul.mubr.f32.gmra.mrb[0].mxu0 %v854
  %v976 = vpop.f32.mrb[0].mxu0
  %v977 = vadd.f32 %v873, %v976
  %v978 = vpop.f32.mrb[0].mxu0
  %979 = vmatprep.mubr.f32.mxu0 0.0
  %980 = vmatmul.mubr.f32.gmra.mrb[0].mxu0 %v855
  %v981 = vpop.f32.mrb[0].mxu0
  %v982 = vadd.f32 %v878, %v981
  %v983 = vpop.f32.mrb[0].mxu0
  %984 = vmatprep.mubr.f32.mxu0 0.0
  %985 = vmatmul.mubr.f32.gmra.mrb[0].mxu0 %v856
  %v986 = vpop.f32.mrb[0].mxu0
  %v987 = vadd.f32 %v883, %v986
  %v988 = vpop.f32.mrb[0].mxu0
  %989 = vmatprep.mubr.f32.mxu0 0.0
  %990 = vmatmul.mubr.f32.gmra.mrb[0].mxu0 %v857
  %v991 = vpop.f32.mrb[0].mxu0
  %v992 = vadd.f32 %v888, %v991
  %v993 = vpop.f32.mrb[0].mxu0
  %994 = vmatprep.mubr.f32.mxu0 0.0
  %995 = vmatmul.mubr.f32.gmra.mrb[0].mxu0 %v858
  %v996 = vpop.f32.mrb[0].mxu0
  %v997 = vadd.f32 %v893, %v996
  %v998 = vpop.f32.mrb[0].mxu0
  %999 = vmatprep.mubr.f32.mxu0 0.0
  %1000 = vmatmul.mubr.f32.gmra.mrb[0].mxu0 %v859
  %v1001 = vpop.f32.mrb[0].mxu0
  %v1002 = vadd.f32 %v898, %v1001
  %v1003 = vpop.f32.mrb[0].mxu0
  %1004 = vmatprep.mubr.f32.mxu0 0.0
  %1005 = vmatmul.mubr.f32.gmra.mrb[0].mxu0 %v860
  %v1006 = vpop.f32.mrb[0].mxu0
  %v1007 = vadd.f32 %v903, %v1006
  %v1008 = vpop.f32.mrb[0].mxu0
  %1009 = vmatprep.mubr.f32.mxu0 0.0
  %1010 = vmatmul.mubr.f32.gmra.mrb[0].mxu0 %v861
  %v1011 = vpop.f32.mrb[0].mxu0
  %v1012 = vadd.f32 %v908, %v1011
  %v1013 = vpop.f32.mrb[0].mxu0
  %1014 = vdwg.mxu0
  %v1015 = vxor.u32 %v977, 2147483648
  %v1016 = vxor.u32 %v982, 2147483648
  %v1017 = vxor.u32 %v987, 2147483648
  %v1018 = vxor.u32 %v992, 2147483648
  %v1019 = vxor.u32 %v997, 2147483648
  %v1020 = vxor.u32 %v1002, 2147483648
  %v1021 = vxor.u32 %v1007, 2147483648
  %v1022 = vxor.u32 %v1012, 2147483648
  %v1023 = vmul.f32 %v1015, 1.442695
  %v1024 = vpow.pop %v1023
  %v1025 = vmul.f32 %v1016, 1.442695
  %v1026 = vpow.pop %v1025
  %v1027 = vmul.f32 %v1017, 1.442695
  %v1028 = vpow.pop %v1027
  %v1029 = vmul.f32 %v1018, 1.442695
  %v1030 = vpow.pop %v1029
  %v1031 = vmul.f32 %v1019, 1.442695
  %v1032 = vpow.pop %v1031
  %v1033 = vmul.f32 %v1020, 1.442695
  %v1034 = vpow.pop %v1033
  %v1035 = vmul.f32 %v1021, 1.442695
  %v1036 = vpow.pop %v1035
  %v1037 = vmul.f32 %v1022, 1.442695
  %v1038 = vpow.pop %v1037
  %v1039 = vadd.f32 %v1024, 1.0
  %v1040 = vadd.f32 %v1026, 1.0
  %v1041 = vadd.f32 %v1028, 1.0
  %v1042 = vadd.f32 %v1030, 1.0
  %v1043 = vadd.f32 %v1032, 1.0
  %v1044 = vadd.f32 %v1034, 1.0
  %v1045 = vadd.f32 %v1036, 1.0
  %v1046 = vadd.f32 %v1038, 1.0
  %v1047 = vrcp.pop %v1039
  %v1048 = vmul.f32 1.0, %v1047
  %v1049 = vrcp.pop %v1040
  %v1050 = vmul.f32 1.0, %v1049
  %v1051 = vrcp.pop %v1041
  %v1052 = vmul.f32 1.0, %v1051
  %v1053 = vrcp.pop %v1042
  %v1054 = vmul.f32 1.0, %v1053
  %v1055 = vrcp.pop %v1043
  %v1056 = vmul.f32 1.0, %v1055
  %v1057 = vrcp.pop %v1044
  %v1058 = vmul.f32 1.0, %v1057
  %v1059 = vrcp.pop %v1045
  %v1060 = vmul.f32 1.0, %v1059
  %v1061 = vrcp.pop %v1046
  %v1062 = vmul.f32 1.0, %v1061
  %v1063 = vld [vmem:[%s8] sm:$0xff]
  %v1064 = vld [vmem:[%s8 + $0x8] sm:$0xff]
  %v1065 = vld [vmem:[%s8 + $0x10] sm:$0xff]
  %v1066 = vld [vmem:[%s8 + $0x18] sm:$0xff]
  %v1067 = vld [vmem:[%s8 + $0x20] sm:$0xff]
  %v1068 = vld [vmem:[%s8 + $0x28] sm:$0xff]
  %v1069 = vld [vmem:[%s8 + $0x30] sm:$0xff]
  %v1070 = vld [vmem:[%s8 + $0x38] sm:$0xff]
  %1072 = vset.pattern.permute.xlu0 0
  %1073 = vperm.xlu0 %1072, %v1063
  %v1074 = vpop.permute.xlu0 %1073
  %1077 = vset.pattern.permute.xlu0 0
  %1078 = vperm.xlu0 %1077, %v1064
  %v1079 = vpop.permute.xlu0 %1078
  %1082 = vset.pattern.permute.xlu0 0
  %1083 = vperm.xlu0 %1082, %v1065
  %v1084 = vpop.permute.xlu0 %1083
  %1087 = vset.pattern.permute.xlu0 0
  %1088 = vperm.xlu0 %1087, %v1066
  %v1089 = vpop.permute.xlu0 %1088
  %1092 = vset.pattern.permute.xlu0 0
  %1093 = vperm.xlu0 %1092, %v1067
  %v1094 = vpop.permute.xlu0 %1093
  %1097 = vset.pattern.permute.xlu0 0
  %1098 = vperm.xlu0 %1097, %v1068
  %v1099 = vpop.permute.xlu0 %1098
  %1102 = vset.pattern.permute.xlu0 0
  %1103 = vperm.xlu0 %1102, %v1069
  %v1104 = vpop.permute.xlu0 %1103
  %1107 = vset.pattern.permute.xlu0 0
  %1108 = vperm.xlu0 %1107, %v1070
  %v1109 = vpop.permute.xlu0 %1108
  %v1111 = vmul.f32 %v1048, %v1074
  %v1112 = vmul.f32 %v1050, %v1079
  %v1113 = vmul.f32 %v1052, %v1084
  %v1114 = vmul.f32 %v1054, %v1089
  %v1115 = vmul.f32 %v1056, %v1094
  %v1116 = vmul.f32 %v1058, %v1099
  %v1117 = vmul.f32 %v1060, %v1104
  %v1118 = vmul.f32 %v1062, %v1109
  %v1119 = vadd.f32 %v1111, %v1112
  %v1120 = vadd.f32 %v1119, %v1113
  %v1121 = vadd.f32 %v1120, %v1114
  %v1122 = vadd.f32 %v1121, %v1115
  %v1123 = vadd.f32 %v1122, %v1116
  %v1124 = vadd.f32 %v1123, %v1117
  %v1125 = vadd.f32 %v1124, %v1118
  %v1126 = vrot.slane %v1125, 4
  %v1127 = vadd.f32 %v1125, %v1126
  %v1128 = vrot.slane %v1127, 2
  %v1129 = vadd.f32 %v1127, %v1128
  %v1130 = vrot.slane %v1129, 1
  %v1131 = vadd.f32 %v1129, %v1130
  %v1132 = vld [vmem:[#allocation2] sm:$0x1]
  %1134 = vset.pattern.permute.xlu0 0
  %1135 = vperm.xlu0 %1134, %v1132
  %v1136 = vpop.permute.xlu0 %1135
  %v1138 = vlaneseq
  %v1139 = vshrl.u32 %v1138, 7
  %v1140 = vsub.s32 0, %v1139
  %v1141 = vrot.slane %v1136, %v1140
  %v1142 = vadd.f32 %v1131, %v1141
  %v1143 = vxor.u32 %v1142, 2147483648
  %v1144 = vmul.f32 %v1143, 1.442695
  %v1145 = vpow.pop %v1144
  %v1146 = vadd.f32 %v1145, 1.0
  %v1147 = vrcp.pop %v1146
  %v1148 = vmul.f32 1.0, %v1147
  %1149 = vst [vmem:[%s10] sm:$0x1] %v1148
  // Predicated region
  $region42: #{ncd_forward.1} parent=0 // pred_check
    _
  $region43: #{ncd_forward.1} parent=0 // pred_check_branch
    %1151 = sbr.rel (0) target = $region45
  $region44: #{ncd_forward.1} parent=0 // pred_region
    _
  $region45: #{ncd_forward.1} parent=0 // pred_fallthru
    _
  // Predicated region
  $region46: #{ncd_forward.1} parent=0 // pred_check
    _
  $region47: #{ncd_forward.1} parent=0 // pred_check_branch
    %1153 = sbr.rel (0) target = $region49
  $region48: #{ncd_forward.1} parent=0 // pred_region
    _
  $region49: #{ncd_forward.1} parent=0 // pred_fallthru
    _

</llo_original>
